<compile_context>
chip_gen: v6e
topology: v6e:2x2x1
jax: 0.10.0
libtpu: 0.0.40
codegen_flags: <defaults>
</compile_context>

<pallas_src>
import math

import jax
import jax.numpy as jnp
from jax import lax
from jax.experimental import pallas as pl
from jax.experimental.pallas import tpu as pltpu


def _round_up(x, m):
    return ((x + m - 1) // m) * m


def _sublane_tile(dtype):
    # Sublane packing tile depends on itemsize: f32 -> 8, bf16 -> 16, int8 -> 32.
    itemsize = jnp.dtype(dtype).itemsize
    return max(8, 32 // max(itemsize, 1))


def _linear_probe_kernel(feat_ref, pnt_ref, logits_ref, featn_ref):
    # feat_ref:   (bn, D)      features tile, native dtype.
    # pnt_ref:    (D, C_pad)   normalized, transposed, scale-folded prototypes
    #                          (constant block index -> DMAed once, resident).
    # logits_ref: (bn, C_pad)  lane-dense logits output tile.
    # featn_ref:  (bn, D)      L2-normalized features output tile.
    f = feat_ref[...].astype(jnp.float32)

    # L2 normalization along the feature dim: x * rsqrt(sum(x^2)) -> EUP rsqrt.
    ssq = jnp.sum(f * f, axis=-1, keepdims=True)
    f_norm = f * lax.rsqrt(ssq)

    # MXU matmul in the prototype dtype (bf16 by default), f32 accumulation.
    logits = jnp.dot(f_norm.astype(pnt_ref.dtype), pnt_ref[...],
                     preferred_element_type=jnp.float32)

    logits_ref[...] = logits.astype(logits_ref.dtype)
    featn_ref[...] = f_norm.astype(featn_ref.dtype)


def linear_probe_head(features, prototypes, logit_scale, *,
                      block_n=512, mxu_dtype=jnp.bfloat16, out_dtype=None):
    """Pallas implementation of LinearProbeHead.forward.

    features:    [N, D]
    prototypes:  [C, D]   (learnable prototypes; zero-shot init in the module)
    logit_scale: scalar   (exp() is applied, as in the PyTorch module)
    mxu_dtype:   matmul dtype (bf16 = full-rate MXU; jnp.float32 = exact)
    out_dtype:   output dtype (defaults to features.dtype)
    Returns (logits [N, C], image_features_norm [N, D]).
    """
    N, D = features.shape
    C, D2 = prototypes.shape
    assert D == D2

    out_dtype = features.dtype if out_dtype is None else jnp.dtype(out_dtype)

    # --- O(C*D) one-time prototype preprocessing (XLA glue) ------------------
    p = prototypes.astype(jnp.float32)
    p_norm = p * lax.rsqrt(jnp.sum(p * p, axis=-1, keepdims=True))
    scale = jnp.exp(jnp.asarray(logit_scale, jnp.float32))
    p_nt = (p_norm * scale).T.astype(mxu_dtype)        # [D, C], scale folded in

    # Lane-dense logits: pad the class dim up to a multiple of 128.
    c_pad = _round_up(C, 128)
    if c_pad != C:
        p_nt = jnp.pad(p_nt, ((0, 0), (0, c_pad - C)))

    # --- Batch tiling ---------------------------------------------------------
    feat_bytes = jnp.dtype(features.dtype).itemsize
    out_bytes = jnp.dtype(out_dtype).itemsize
    prot_bytes = jnp.dtype(p_nt.dtype).itemsize
    sub = max(_sublane_tile(features.dtype), _sublane_tile(out_dtype))

    bn = max(sub, min(_round_up(block_n, sub), _round_up(N, sub)))

    # Keep double-buffered tiles + resident prototypes under a conservative
    # VMEM budget; 32 MiB scoped limit is valid on v5e / v6e / v7x.
    vmem_limit = 32 * 1024 * 1024
    vmem_budget = 28 * 1024 * 1024

    def _vmem_bytes(b):
        return (2 * b * D * feat_bytes          # features in (double buffered)
                + 2 * b * D * out_bytes         # normalized-features out
                + 2 * b * c_pad * out_bytes     # logits out
                + 2 * D * c_pad * prot_bytes    # resident prototypes
                + b * (D + c_pad) * 4)          # in-kernel f32 temporaries

    while bn > sub and _vmem_bytes(bn) > vmem_budget:
        bn = max(sub, _round_up(bn // 2, sub))
    # TODO(synk): for very large C*D (e.g. D>=1024, C>=16k) add a class-tiled
    # second grid axis instead of keeping the whole [D, c_pad] block resident.

    grid = (pl.cdiv(N, bn),)   # ragged last block is masked on writeback

    grid_spec = pltpu.PrefetchScalarGridSpec(
        num_scalar_prefetch=0,
        grid=grid,
        in_specs=[
            pl.BlockSpec((bn, D), lambda i: (i, 0)),      # features tile
            pl.BlockSpec((D, c_pad), lambda i: (0, 0)),   # resident prototypes
        ],
        out_specs=(
            pl.BlockSpec((bn, c_pad), lambda i: (i, 0)),  # lane-dense logits
            pl.BlockSpec((bn, D), lambda i: (i, 0)),      # normalized features
        ),
    )

    cost = pl.CostEstimate(
        flops=2 * N * D * c_pad + 4 * N * D,
        transcendentals=N,
        bytes_accessed=(N * D * feat_bytes + D * c_pad * prot_bytes
                        + N * c_pad * out_bytes + N * D * out_bytes),
    )

    logits_p, featn = pl.pallas_call(
        _linear_probe_kernel,
        grid_spec=grid_spec,
        out_shape=(
            jax.ShapeDtypeStruct((N, c_pad), out_dtype),
            jax.ShapeDtypeStruct((N, D), out_dtype),
        ),
        compiler_params=pltpu.CompilerParams(
            dimension_semantics=("parallel",),
            vmem_limit_bytes=vmem_limit),
        cost_estimate=cost,
    )(features, p_nt)

    # Slice off the class padding (batch dim is unpadded).
    return logits_p[:, :C], featn


def _reference(features, prototypes, logit_scale):
    fn = features / jnp.linalg.norm(features, axis=-1, keepdims=True)
    pn = prototypes / jnp.linalg.norm(prototypes, axis=-1, keepdims=True)
    return fn @ pn.T * jnp.exp(logit_scale), fn


if __name__ == "__main__":
    key = jax.random.PRNGKey(0)
    k_feat, k_prot = jax.random.split(key)

    N, D, C = 16, 32, 4                    # batch, feature dim, num classes

    # Deterministic "zero-shot" prototypes (init='zero_shot' branch) and the
    # frozen logit_scale (CLIP-style log(1/0.07)).
    zero_shot_prot = jax.random.normal(k_prot, (C, D), dtype=jnp.float32)
    prototypes = zero_shot_prot            # Parameter init = clone of zero-shot
    logit_scale = jnp.asarray(math.log(1.0 / 0.07), dtype=jnp.float32)

    features = jax.random.normal(k_feat, (N, D), dtype=jnp.float32)

    ref_logits, ref_feat_norm = _reference(features, prototypes, logit_scale)

    # Default (bf16 MXU) path.
    logits, feat_norm = linear_probe_head(features, prototypes, logit_scale)
    jax.block_until_ready((logits, feat_norm))
    assert jnp.allclose(logits, ref_logits, atol=2e-1, rtol=0.0), "bf16 logits mismatch"
    assert jnp.allclose(feat_norm, ref_feat_norm, atol=1e-5, rtol=1e-5), "featn mismatch"

    # Full-precision MXU path matches tightly.
    logits32, feat_norm32 = linear_probe_head(
        features, prototypes, logit_scale, mxu_dtype=jnp.float32)
    jax.block_until_ready((logits32, feat_norm32))
    assert jnp.allclose(logits32, ref_logits, atol=1e-4, rtol=1e-4), "f32 logits mismatch"
    assert jnp.allclose(feat_norm32, ref_feat_norm, atol=1e-5, rtol=1e-5), "featn mismatch"

    print("KERNEL_OK")
</pallas_src>

<mosaic_0001>
module attributes {stable_mosaic.version = 11 : i64} {
  func.func @_linear_probe_kernel(%arg0: i32, %arg1: memref<16x32xf32, #tpu.memory_space<vmem>>, %arg2: memref<32x128xbf16, #tpu.memory_space<vmem>>, %arg3: memref<16x128xf32, #tpu.memory_space<vmem>>, %arg4: memref<16x32xf32, #tpu.memory_space<vmem>>) attributes {dimension_semantics = [#tpu.dimension_semantics<parallel>], iteration_bounds = array<i64: 1>, scalar_prefetch = 0 : i64, scratch_operands = 0 : i64, tpu.core_type = #tpu.core_type<tc>, window_params = [{transform_indices = @transform_0, window_bounds = array<i64: 16, 32>}, {pipeline_mode = #tpu.pipeline_mode<synchronous>, transform_indices = @transform_1, window_bounds = array<i64: 32, 128>}, {transform_indices = @transform_2, window_bounds = array<i64: 16, 128>}, {transform_indices = @transform_3, window_bounds = array<i64: 16, 32>}]} {
    %c0 = arith.constant 0 : index
    %c0_0 = arith.constant 0 : index
    %0 = vector.load %arg1[%c0, %c0_0] : memref<16x32xf32, #tpu.memory_space<vmem>>, vector<16x32xf32>
    %1 = arith.mulf %0, %0 : vector<16x32xf32>
    %cst = arith.constant dense<0.000000e+00> : vector<16xf32>
    %2 = vector.multi_reduction <add>, %1, %cst [1] : vector<16x32xf32> to vector<16xf32>
    %3 = vector.shape_cast %2 : vector<16xf32> to vector<16x1xf32>
    %4 = math.rsqrt %3 : vector<16x1xf32>
    %5 = vector.broadcast %4 : vector<16x1xf32> to vector<16x32xf32>
    %6 = arith.mulf %0, %5 : vector<16x32xf32>
    %7 = arith.truncf %6 : vector<16x32xf32> to vector<16x32xbf16>
    %c0_1 = arith.constant 0 : index
    %c0_2 = arith.constant 0 : index
    %8 = vector.load %arg2[%c0_1, %c0_2] : memref<32x128xbf16, #tpu.memory_space<vmem>>, vector<32x128xbf16>
    %cst_3 = arith.constant dense<0.000000e+00> : vector<16x128xf32>
    %9 = tpu.matmul %7, %8, %cst_3 {dimension_numbers = #tpu.dot_dimension_numbers<[1], [0], [0], [1], [0, 0, 1, 1], [], []>} : vector<16x32xbf16>, vector<32x128xbf16>, vector<16x128xf32> -> vector<16x128xf32>
    %c0_4 = arith.constant 0 : index
    %c0_5 = arith.constant 0 : index
    %10 = vector.load %arg3[%c0_4, %c0_5] : memref<16x128xf32, #tpu.memory_space<vmem>>, vector<16x128xf32>
    tpu.vector_store %arg3[%c0_4, %c0_5], %9 {strides = array<i32>} : memref<16x128xf32, #tpu.memory_space<vmem>>, vector<16x128xf32>,
    %c0_6 = arith.constant 0 : index
    %c0_7 = arith.constant 0 : index
    %11 = vector.load %arg4[%c0_6, %c0_7] : memref<16x32xf32, #tpu.memory_space<vmem>>, vector<16x32xf32>
    tpu.vector_store %arg4[%c0_6, %c0_7], %6 {strides = array<i32>} : memref<16x32xf32, #tpu.memory_space<vmem>>, vector<16x32xf32>,
    return
  }
  func.func @transform_0(%arg0: i32) -> (i32, i32) {
    %c0_i32 = arith.constant 0 : i32
    %c0_i32_0 = arith.constant 0 : i32
    return %arg0, %c0_i32 : i32, i32
  }
  func.func @transform_1(%arg0: i32) -> (i32, i32) {
    %c0_i32 = arith.constant 0 : i32
    %c0_i32_0 = arith.constant 0 : i32
    %c0_i32_1 = arith.constant 0 : i32
    return %c0_i32, %c0_i32_0 : i32, i32
  }
  func.func @transform_2(%arg0: i32) -> (i32, i32) {
    %c0_i32 = arith.constant 0 : i32
    %c0_i32_0 = arith.constant 0 : i32
    return %arg0, %c0_i32 : i32, i32
  }
  func.func @transform_3(%arg0: i32) -> (i32, i32) {
    %c0_i32 = arith.constant 0 : i32
    %c0_i32_0 = arith.constant 0 : i32
    return %arg0, %c0_i32 : i32, i32
  }
}

</mosaic_0001>

<llo_original>
// kernel: tpu_custom_call.1
$region0: #{tpu_custom_call.1}
  #allocation0 [shape = 'u32[]', space=smem, size = 0x4, offset = 0x4, fixed_abs, tag = 'smem constant byte address 0x4 - core index']
  #allocation1 [shape = 'u32[144,128]{1,0:T(1,128)}', space=vmem, size = 0x12000, scoped, tag = 'internal scratch']
  %s0 = inlined_call_operand.hbm [shape: f32[16,32], index: 0, kind: input, shape index: {}]
  %s1 = inlined_call_operand.hbm [shape: bf16[32,128], index: 1, kind: input, shape index: {}]
  %s2 = inlined_call_operand.hbm [shape: f32[16,128], index: 2, kind: output, shape index: {0}]
  %s3 = inlined_call_operand.hbm [shape: f32[16,32], index: 3, kind: output, shape index: {1}]
  %4 = xla_tuple %s2, %s3
  %s5 = sld [smem:[#allocation0]]
  $region34: #{tpu_custom_call.1} parent=0
    _
  %s7 = ssub.s32 1, %s5
  %s8 = scalar_select 0, %s7, %s5
  $region1: #{tpu_custom_call.1} parent=0
    #allocation2 [shape = 'u8[8192]{0}', space=vmem, size = 0x2000, scoped, tag = 'input window, operand 0, single buffered']
    #allocation3 [shape = 's32[1]{0}', space=sflag, size = 0x4, scoped, tag = 'scoped memory for tpu_custom_call.1']
    #allocation4 [shape = 's32[1]{0}', space=sflag, size = 0x4, scoped, tag = 'scoped memory for tpu_custom_call.1']
    #allocation5 [shape = 'u8[8192]{0}', space=vmem, size = 0x2000, scoped, tag = 'input window, operand 1, single buffered']
    #allocation6 [shape = 's32[1]{0}', space=sflag, size = 0x4, scoped, tag = 'scoped memory for tpu_custom_call.1']
    #allocation7 [shape = 'u8[8192]{0}', space=vmem, size = 0x2000, scoped, tag = 'output window, operand 0, single buffered']
    #allocation8 [shape = 'u8[8192]{0}', space=vmem, size = 0x2000, scoped, tag = 'output window, operand 1, single buffered']
    #allocation9 [shape = 's32[1]{0}', space=sflag, size = 0x4, scoped, tag = 'scoped memory for tpu_custom_call.1']
    %9 = vsyncpa [#allocation3], 0
    %10 = vsyncpa [#allocation6], 0
    %11 = vsyncpa [#allocation4], 0
    %12 = vsyncpa [#allocation9], 0
    // Predicated region
    $region2: #{tpu_custom_call.1} parent=1 // pred_check
      _
    $region3: #{tpu_custom_call.1} parent=1 // pred_check_branch
      %14 = sbr.rel (0) target = $region5
    $region4: #{tpu_custom_call.1} parent=1 // pred_region
      %s16 = ssub.s32 256, 256
      %17 = vsyncadd [#allocation3], %s16
      %s18 = sshll.u32 [#allocation2], 4
      %s19 = int_to_ptr.vmem [resolvable:$true] %s18
      %24 = dma.hbm_to_vmem [thread:$0]  %s0, 256, %s19, [#allocation3], 128, 128, 8
    $region5: #{tpu_custom_call.1} parent=1 // pred_fallthru
      _
    // Predicated region
    $region6: #{tpu_custom_call.1} parent=1 // pred_check
      _
    $region7: #{tpu_custom_call.1} parent=1 // pred_check_branch
      %26 = sbr.rel (0) target = $region9
    $region8: #{tpu_custom_call.1} parent=1 // pred_region
      %s28 = ssub.s32 256, 256
      %29 = vsyncadd [#allocation6], %s28
      %s30 = sshll.u32 [#allocation5], 4
      %s31 = int_to_ptr.vmem [resolvable:$true] %s30
      %36 = dma.hbm_to_vmem [thread:$0]  %s1, 256, %s31, [#allocation6], 64, 64, 4
    $region9: #{tpu_custom_call.1} parent=1 // pred_fallthru
      _
    // Predicated region
    $region10: #{tpu_custom_call.1} parent=1 // pred_check
      _
    $region11: #{tpu_custom_call.1} parent=1 // pred_check_branch
      %38 = sbr.rel (0) target = $region13
    $region12: #{tpu_custom_call.1} parent=1 // pred_region
      %39 = dma.done [#allocation3], 256
    $region13: #{tpu_custom_call.1} parent=1 // pred_fallthru
      _
    // Predicated region
    $region14: #{tpu_custom_call.1} parent=1 // pred_check
      _
    $region15: #{tpu_custom_call.1} parent=1 // pred_check_branch
      %41 = sbr.rel (0) target = $region17
    $region16: #{tpu_custom_call.1} parent=1 // pred_region
      %42 = dma.done [#allocation6], 256
    $region17: #{tpu_custom_call.1} parent=1 // pred_fallthru
      _
    %v44 = vld [vmem:[#allocation2] sm:$0xff]
    %v45 = vld [vmem:[#allocation2 + $0x8] sm:$0xff]
    %v46 = vmul.f32 %v44, %v44
    %v47 = vmul.f32 %v45, %v45
    %vm48 = vcmask 261120
    %v49 = vsel %vm48, %v46, 0.0
    %50 = vadd.xlane.f32.xlu0 %v49
    %v51 = vpop.xlane.xlu0 %50
    %v52 = vsel %vm48, %v47, 0.0
    %53 = vadd.xlane.f32.xlu0 %v52
    %v54 = vpop.xlane.xlu0 %53
    %v55 = vrsqrt.pop %v51
    %v56 = vrsqrt.pop %v54
    %v57 = vmul.f32 %v44, %v55
    %v58 = vmul.f32 %v45, %v56
    %v59 = vpack.c.bf16 %v58, %v57
    %v60 = vld [vmem:[#allocation5] sm:$0xf]
    %v61 = vld [vmem:[#allocation5 + $0x4] sm:$0xf]
    %v62 = vld [vmem:[#allocation5 + $0x8] sm:$0xf]
    %v63 = vld [vmem:[#allocation5 + $0xc] sm:$0xf]
    %v68 = vunpack.c.l.b16 %v60
    %v69 = vunpack.c.l.b16 %v61
    %v70 = vunpack.c.l.b16 %v62
    %v71 = vunpack.c.l.b16 %v63
    %v72 = vpack.c.b16 %v69, %v68
    %v73 = vpack.c.b16 %v71, %v70
    %v77 = vsel %vm48, %v59, 0
    %79 = vmatprep.subr.bf16.mxu0 0
    %80 = vmatpush1.bf16.msra.mxu0 0
    %81 = vmatprep.subr.bf16.mxu0 0
    %82 = vmatpush1.bf16.msra.mxu0 0
    %83 = vmatprep.subr.bf16.mxu0 0
    %84 = vmatpush1.bf16.msra.mxu0 0
    %85 = vmatprep.subr.bf16.mxu0 0
    %86 = vmatpush1.bf16.msra.mxu0 0
    %87 = vmatprep.subr.bf16.mxu0 0
    %88 = vmatpush1.bf16.msra.mxu0 0
    %89 = vmatprep.subr.bf16.mxu0 0
    %90 = vmatpush1.bf16.msra.mxu0 0
    %91 = vmatprep.subr.bf16.mxu0 0
    %92 = vmatpush1.bf16.msra.mxu0 %v73
    %93 = vmatprep.subr.bf16.mxu0 0
    %94 = vmatpush1.bf16.msra.mxu0 %v72
    %95 = vmatprep.subr.bf16.mxu0 0
    %96 = vmatpush2.bf16.msra.mxu0 0
    %97 = vmatprep.subr.bf16.mxu0 0
    %98 = vmatpush2.bf16.msra.mxu0 0
    %99 = vmatprep.subr.bf16.mxu0 0
    %100 = vmatpush2.bf16.msra.mxu0 0
    %101 = vmatprep.subr.bf16.mxu0 0
    %102 = vmatpush2.bf16.msra.mxu0 0
    %103 = vmatprep.subr.bf16.mxu0 0
    %104 = vmatpush2.bf16.msra.mxu0 0
    %105 = vmatprep.subr.bf16.mxu0 0
    %106 = vmatpush2.bf16.msra.mxu0 0
    %107 = vmatprep.subr.bf16.mxu0 0
    %108 = vmatpush2.bf16.msra.mxu0 0
    %109 = vmatprep.subr.bf16.mxu0 0
    %110 = vmatpush2.bf16.msra.mxu0 0
    %111 = vmatprep.mubr.bf16.mxu0 0
    %112 = vmatmul.mubr.bf16.gmra.mxu0 %v77
    %v113 = vpop.f32.mrf.mxu0
    %v114 = vadd.f32 0.0, %v113
    %v115 = vpop.f32.mrf.mxu0
    %v116 = vpop.f32.mrf.mxu0
    %v117 = vadd.f32 0.0, %v116
    %v118 = vpop.f32.mrf.mxu0
    %119 = vdwg.mxu0
    %120 = vst [vmem:[#allocation7] sm:$0xff] %v114
    %121 = vst [vmem:[#allocation7 + $0x8] sm:$0xff] %v117
    %122 = vst.msk [vmem:[#allocation8] sm:$0xff] %vm48, %v57
    %123 = vst.msk [vmem:[#allocation8 + $0x8] sm:$0xff] %vm48, %v58
    // Predicated region
    $region18: #{tpu_custom_call.1} parent=1 // pred_check
      _
    $region19: #{tpu_custom_call.1} parent=1 // pred_check_branch
      %125 = sbr.rel (0) target = $region21
    $region20: #{tpu_custom_call.1} parent=1 // pred_region
      %s127 = ssub.s32 256, 256
      %128 = vsyncadd [#allocation4], %s127
      %s129 = sshll.u32 [#allocation7], 4
      %s130 = int_to_ptr.vmem [resolvable:$true] %s129
      %135 = dma.vmem_to_hbm [thread:$0]  %s130, 256, %s2, [#allocation4], 128, 128, 8
    $region21: #{tpu_custom_call.1} parent=1 // pred_fallthru
      _
    // Predicated region
    $region22: #{tpu_custom_call.1} parent=1 // pred_check
      _
    $region23: #{tpu_custom_call.1} parent=1 // pred_check_branch
      %137 = sbr.rel (0) target = $region25
    $region24: #{tpu_custom_call.1} parent=1 // pred_region
      %s139 = ssub.s32 256, 256
      %140 = vsyncadd [#allocation9], %s139
      %s141 = sshll.u32 [#allocation8], 4
      %s142 = int_to_ptr.vmem [resolvable:$true] %s141
      %147 = dma.vmem_to_hbm [thread:$0]  %s142, 256, %s3, [#allocation9], 128, 128, 8
    $region25: #{tpu_custom_call.1} parent=1 // pred_fallthru
      _
    // Predicated region
    $region26: #{tpu_custom_call.1} parent=1 // pred_check
      _
    $region27: #{tpu_custom_call.1} parent=1 // pred_check_branch
      %149 = sbr.rel (0) target = $region29
    $region28: #{tpu_custom_call.1} parent=1 // pred_region
      %150 = dma.done [#allocation4], 256
    $region29: #{tpu_custom_call.1} parent=1 // pred_fallthru
      _
    // Predicated region
    $region30: #{tpu_custom_call.1} parent=1 // pred_check
      _
    $region31: #{tpu_custom_call.1} parent=1 // pred_check_branch
      %152 = sbr.rel (0) target = $region33
    $region32: #{tpu_custom_call.1} parent=1 // pred_region
      %153 = dma.done [#allocation9], 256
    $region33: #{tpu_custom_call.1} parent=1 // pred_fallthru
      _
    %154 = vsyncpa [#allocation3], 1
    %155 = vsyncpa [#allocation6], 1
    %156 = vsyncpa [#allocation4], 1
    %157 = vsyncpa [#allocation9], 1

</llo_original>
